<compile_context>
chip_gen: v5e
topology: v5e:2x2
jax: 0.10.0
libtpu: 0.0.40
codegen_flags: <defaults>
</compile_context>

<pallas_src>
import functools

import jax
import jax.numpy as jnp
from jax.experimental import pallas as pl
from jax.experimental.pallas import tpu as pltpu


def _lstm_kernel(x_ref, w_ih_ref, w_hh_ref, b_ref, w_lin_ref, b_lin_ref,
                 out_ref, gx_sc, h_all_sc, *, seq_len, batch_tile, hidden_size):
    H = hidden_size
    B = batch_tile

    # ---- Hoisted input projection: one big matmul for every timestep.
    #      (S*B, D_in) @ (D_in, 4H) + bias  -> VMEM scratch.
    gx_sc[...] = (
        jnp.dot(x_ref[...], w_ih_ref[...], preferred_element_type=jnp.float32)
        + b_ref[...])

    # Recurrent weight resident in VMEM once, reused by every step.
    w_hh = w_hh_ref[...]

    # Constants for the single-tanh gate evaluation, hoisted out of the loop.
    # PyTorch gate order [i, f, g, o]: only the g block uses raw tanh; the
    # i/f/o blocks use sigmoid(x) = 0.5*(1 + tanh(x/2)).
    lane = jax.lax.broadcasted_iota(jnp.int32, (B, 4 * H), 1)
    is_g = (lane >= 2 * H) & (lane < 3 * H)
    pre_scale = jnp.where(is_g, 1.0, 0.5).astype(jnp.float32)   # also post-scale
    post_shift = jnp.where(is_g, 0.0, 0.5).astype(jnp.float32)

    def step(t, carry):
        h, c = carry                          # recurrent state stays in vregs
        row = pl.multiple_of(t * B, B)
        # Single MXU matmul on the serial critical path (x-part was hoisted).
        gates = gx_sc[pl.ds(row, B), :] + jnp.dot(
            h, w_hh, preferred_element_type=jnp.float32)
        # One 128-lane EUP tanh pass instead of tanh+sigmoid over the full vreg.
        y = jnp.tanh(gates * pre_scale)
        act = y * pre_scale + post_shift      # g: tanh(x); i/f/o: sigmoid(x)
        i_g = act[:, 0 * H:1 * H]
        f_g = act[:, 1 * H:2 * H]
        g_g = act[:, 2 * H:3 * H]
        o_g = act[:, 3 * H:4 * H]

        c_new = f_g * c + i_g * g_g
        h_new = o_g * jnp.tanh(c_new)

        h_all_sc[pl.ds(row, B), :] = h_new    # collect h_t for deferred head
        return (h_new, c_new)

    h0 = jnp.zeros((B, H), jnp.float32)       # PyTorch default zero init
    c0 = jnp.zeros((B, H), jnp.float32)
    # Full unroll only for short sequences; cap otherwise to avoid vreg spills.
    unroll = True if seq_len <= 8 else 8
    jax.lax.fori_loop(0, seq_len, step, (h0, c0), unroll=unroll)

    # ---- Deferred Linear head: one (S*B, H) @ (H, O_pad) matmul + single
    #      lane-dense (unmasked) store.
    out_ref[...] = (
        jnp.dot(h_all_sc[...], w_lin_ref[...],
                preferred_element_type=jnp.float32)
        + b_lin_ref[...]).astype(out_ref.dtype)


def lstm_rnn_forward(x, params):
    """x: (S, B, D_in) f32 -> (S, B, output_size) f32."""
    S, B, D_in = x.shape
    w_ih_t = params["w_ih_t"]        # (D_in, 4H)
    w_hh_t = params["w_hh_t"]        # (H, 4H)
    b_gates = params["b_gates"]      # (1, 4H)  == b_ih + b_hh
    w_lin_t = params["w_lin_t"]      # (H, O)
    b_lin = params["b_lin"]          # (1, O)

    H = w_hh_t.shape[0]
    O = w_lin_t.shape[1]

    # Pad batch (sublane axis) to a multiple of 8 only when necessary; padded
    # rows are independent of the real ones and sliced off after the kernel.
    B_pad = ((B + 7) // 8) * 8
    if B_pad != B:
        x_pad = jnp.zeros((S, B_pad, D_in), x.dtype).at[:, :B, :].set(x)
    else:
        x_pad = x

    # Lane-dense output head: zero-pad the Linear weight/bias to a multiple of
    # 128 output columns (one-time, tiny) so the kernel's final store is an
    # unmasked vst; extra columns are sliced off outside.
    O_pad = ((O + 127) // 128) * 128
    if O_pad != O:
        w_lin_p = jnp.zeros((H, O_pad), w_lin_t.dtype).at[:, :O].set(w_lin_t)
        b_lin_p = jnp.zeros((1, O_pad), b_lin.dtype).at[:, :O].set(b_lin)
    else:
        w_lin_p, b_lin_p = w_lin_t, b_lin

    # Batch-tile grid axis ("parallel"): lets megacore parts (v7x) shard the
    # independent batch rows across TensorCores; a single tile elsewhere.
    nb = 2 if B_pad >= 16 else 1
    bt = B_pad // nb
    if nb == 1:
        x_tiles = x_pad.reshape(1, S * bt, D_in)
    else:
        x_tiles = (x_pad.reshape(S, nb, bt, D_in)
                   .transpose(1, 0, 2, 3).reshape(nb, S * bt, D_in))

    kernel = functools.partial(_lstm_kernel, seq_len=S, batch_tile=bt,
                               hidden_size=H)

    # Explicit VMEM budget (default scoped limit is 16 MiB on v5e / 32 MiB on
    # v6e & v7x); sized from scratch + resident blocks with headroom.
    # TODO(synk): for very large S*B (v7x 64 MiB VMEM), chunk the sequence over
    # an "arbitrary" grid axis instead of keeping gx/h_all fully resident.
    scratch_bytes = (S * bt * 4 * H + S * bt * H) * 4
    block_bytes = (S * bt * D_in + S * bt * O_pad
                   + w_ih_t.size + w_hh_t.size + b_gates.size
                   + w_lin_p.size + b_lin_p.size) * 4
    vmem_limit = int(min(110 * 2 ** 20,
                         max(32 * 2 ** 20,
                             2 * (scratch_bytes + 2 * block_bytes))))

    y = pl.pallas_call(
        kernel,
        out_shape=jax.ShapeDtypeStruct((nb, S * bt, O_pad), jnp.float32),
        grid_spec=pltpu.PrefetchScalarGridSpec(
            num_scalar_prefetch=0,
            grid=(nb,),
            in_specs=[
                pl.BlockSpec((None, S * bt, D_in), lambda b: (b, 0, 0)),
                pl.BlockSpec((D_in, 4 * H), lambda b: (0, 0)),
                pl.BlockSpec((H, 4 * H), lambda b: (0, 0)),
                pl.BlockSpec((1, 4 * H), lambda b: (0, 0)),
                pl.BlockSpec((H, O_pad), lambda b: (0, 0)),
                pl.BlockSpec((1, O_pad), lambda b: (0, 0)),
            ],
            out_specs=pl.BlockSpec((None, S * bt, O_pad), lambda b: (b, 0, 0)),
            scratch_shapes=[
                pltpu.VMEM((S * bt, 4 * H), jnp.float32),  # hoisted x@W_ih + b
                pltpu.VMEM((S * bt, H), jnp.float32),      # all hidden states
            ],
        ),
        compiler_params=pltpu.CompilerParams(
            dimension_semantics=("parallel",),
            vmem_limit_bytes=vmem_limit,
        ),
    )(x_tiles, w_ih_t, w_hh_t, b_gates, w_lin_p, b_lin_p)

    if nb == 1:
        y = y.reshape(S, bt, O_pad)
    else:
        y = (y.reshape(nb, S, bt, O_pad)
             .transpose(1, 0, 2, 3).reshape(S, B_pad, O_pad))
    return y[:, :B, :O]


def init_params(key, input_size, hidden_size, output_size):
    """Deterministic init matching the PyTorch parameter shapes."""
    ks = jax.random.split(key, 6)
    k = 1.0 / jnp.sqrt(jnp.float32(hidden_size))
    u = lambda kk, shape: jax.random.uniform(kk, shape, jnp.float32, -k, k)

    w_ih = u(ks[0], (4 * hidden_size, input_size))   # lstm.weight_ih_l0
    w_hh = u(ks[1], (4 * hidden_size, hidden_size))  # lstm.weight_hh_l0
    b_ih = u(ks[2], (4 * hidden_size,))              # lstm.bias_ih_l0
    b_hh = u(ks[3], (4 * hidden_size,))              # lstm.bias_hh_l0
    w_lin = u(ks[4], (output_size, hidden_size))     # linear1.weight
    b_lin = u(ks[5], (output_size,))                 # linear1.bias

    return {
        "w_ih_t": w_ih.T,                               # (D_in, 4H)
        "w_hh_t": w_hh.T,                               # (H, 4H)
        "b_gates": (b_ih + b_hh).reshape(1, -1),        # (1, 4H)
        "w_lin_t": w_lin.T,                             # (H, O)
        "b_lin": b_lin.reshape(1, -1),                  # (1, O)
    }


def reference_forward(x, params):
    """Pure-JAX reference (same math as torch nn.LSTM + nn.Linear)."""
    H = params["w_hh_t"].shape[0]
    B = x.shape[1]

    def step(carry, x_t):
        h, c = carry
        gates = x_t @ params["w_ih_t"] + h @ params["w_hh_t"] + params["b_gates"]
        i = jax.nn.sigmoid(gates[:, 0 * H:1 * H])
        f = jax.nn.sigmoid(gates[:, 1 * H:2 * H])
        g = jnp.tanh(gates[:, 2 * H:3 * H])
        o = jax.nn.sigmoid(gates[:, 3 * H:4 * H])
        c_new = f * c + i * g
        h_new = o * jnp.tanh(c_new)
        y = h_new @ params["w_lin_t"] + params["b_lin"]
        return (h_new, c_new), y

    init = (jnp.zeros((B, H), jnp.float32), jnp.zeros((B, H), jnp.float32))
    _, ys = jax.lax.scan(step, init, x)
    return ys


if __name__ == "__main__":
    SEQ, BATCH = 8, 4
    INPUT_SIZE, HIDDEN_SIZE, OUTPUT_SIZE = 16, 32, 8

    key = jax.random.PRNGKey(0)
    k_x, k_p = jax.random.split(key)
    x = jax.random.normal(k_x, (SEQ, BATCH, INPUT_SIZE), jnp.float32)
    params = init_params(k_p, INPUT_SIZE, HIDDEN_SIZE, OUTPUT_SIZE)

    out = jax.block_until_ready(lstm_rnn_forward(x, params))
    ref = reference_forward(x, params)

    assert out.shape == (SEQ, BATCH, OUTPUT_SIZE)
    assert jnp.allclose(out, ref, atol=2e-5, rtol=2e-5), "mismatch vs reference"

    print("KERNEL_OK")
</pallas_src>

<mosaic_0001>
module attributes {stable_mosaic.version = 11 : i64} {
  func.func @_lstm_kernel(%arg0: i32, %arg1: memref<1x64x16xf32, #tpu.memory_space<vmem>>, %arg2: memref<16x128xf32, #tpu.memory_space<vmem>>, %arg3: memref<32x128xf32, #tpu.memory_space<vmem>>, %arg4: memref<1x128xf32, #tpu.memory_space<vmem>>, %arg5: memref<32x128xf32, #tpu.memory_space<vmem>>, %arg6: memref<1x128xf32, #tpu.memory_space<vmem>>, %arg7: memref<1x64x128xf32, #tpu.memory_space<vmem>>, %arg8: memref<64x128xf32, #tpu.memory_space<vmem>>, %arg9: memref<64x32xf32, #tpu.memory_space<vmem>>) attributes {dimension_semantics = [#tpu.dimension_semantics<parallel>], iteration_bounds = array<i64: 1>, scalar_prefetch = 0 : i64, scratch_operands = 2 : i64, tpu.core_type = #tpu.core_type<tc>, window_params = [{transform_indices = @transform_0, window_bounds = array<i64: 1, 64, 16>}, {pipeline_mode = #tpu.pipeline_mode<synchronous>, transform_indices = @transform_1, window_bounds = array<i64: 16, 128>}, {pipeline_mode = #tpu.pipeline_mode<synchronous>, transform_indices = @transform_2, window_bounds = array<i64: 32, 128>}, {pipeline_mode = #tpu.pipeline_mode<synchronous>, transform_indices = @transform_3, window_bounds = array<i64: 1, 128>}, {pipeline_mode = #tpu.pipeline_mode<synchronous>, transform_indices = @transform_4, window_bounds = array<i64: 32, 128>}, {pipeline_mode = #tpu.pipeline_mode<synchronous>, transform_indices = @transform_5, window_bounds = array<i64: 1, 128>}, {transform_indices = @transform_6, window_bounds = array<i64: 1, 64, 128>}]} {
    %c0 = arith.constant 0 : index
    %c0_0 = arith.constant 0 : index
    %c0_1 = arith.constant 0 : index
    %0 = vector.load %arg1[%c0, %c0_0, %c0_1] : memref<1x64x16xf32, #tpu.memory_space<vmem>>, vector<1x64x16xf32>
    %1 = vector.shape_cast %0 : vector<1x64x16xf32> to vector<64x16xf32>
    %c0_2 = arith.constant 0 : index
    %c0_3 = arith.constant 0 : index
    %2 = vector.load %arg2[%c0_2, %c0_3] : memref<16x128xf32, #tpu.memory_space<vmem>>, vector<16x128xf32>
    %cst = arith.constant dense<0.000000e+00> : vector<64x128xf32>
    %3 = tpu.matmul %1, %2, %cst {dimension_numbers = #tpu.dot_dimension_numbers<[1], [0], [0], [1], [0, 0, 1, 1], [], []>} : vector<64x16xf32>, vector<16x128xf32>, vector<64x128xf32> -> vector<64x128xf32>
    %c0_4 = arith.constant 0 : index
    %c0_5 = arith.constant 0 : index
    %4 = vector.load %arg4[%c0_4, %c0_5] : memref<1x128xf32, #tpu.memory_space<vmem>>, vector<1x128xf32>
    %5 = vector.broadcast %4 : vector<1x128xf32> to vector<64x128xf32>
    %6 = arith.addf %3, %5 : vector<64x128xf32>
    %c0_6 = arith.constant 0 : index
    %c0_7 = arith.constant 0 : index
    %7 = vector.load %arg8[%c0_6, %c0_7] : memref<64x128xf32, #tpu.memory_space<vmem>>, vector<64x128xf32>
    tpu.vector_store %arg8[%c0_6, %c0_7], %6 {strides = array<i32>} : memref<64x128xf32, #tpu.memory_space<vmem>>, vector<64x128xf32>,
    %c0_8 = arith.constant 0 : index
    %c0_9 = arith.constant 0 : index
    %8 = vector.load %arg3[%c0_8, %c0_9] : memref<32x128xf32, #tpu.memory_space<vmem>>, vector<32x128xf32>
    %9 = tpu.iota {dimensions = array<i32: 1>} : vector<8x128xi32>
    %c64_i32 = arith.constant 64 : i32
    %10 = vector.broadcast %c64_i32 : i32 to vector<8x128xi32>
    %11 = arith.cmpi sge, %9, %10 : vector<8x128xi32>
    %c96_i32 = arith.constant 96 : i32
    %12 = vector.broadcast %c96_i32 : i32 to vector<8x128xi32>
    %13 = arith.cmpi slt, %9, %12 : vector<8x128xi32>
    %14 = arith.andi %11, %13 : vector<8x128xi1>
    %cst_10 = arith.constant 1.000000e+00 : f32
    %cst_11 = arith.constant 5.000000e-01 : f32
    %15 = vector.broadcast %cst_10 : f32 to vector<8x128xf32>
    %16 = vector.broadcast %cst_11 : f32 to vector<8x128xf32>
    %17 = arith.select %14, %15, %16 : vector<8x128xi1>, vector<8x128xf32>
    %cst_12 = arith.constant 0.000000e+00 : f32
    %cst_13 = arith.constant 5.000000e-01 : f32
    %18 = vector.broadcast %cst_12 : f32 to vector<8x128xf32>
    %19 = vector.broadcast %cst_13 : f32 to vector<8x128xf32>
    %20 = arith.select %14, %18, %19 : vector<8x128xi1>, vector<8x128xf32>
    %cst_14 = arith.constant 0.000000e+00 : f32
    %21 = vector.broadcast %cst_14 : f32 to vector<8x32xf32>
    %cst_15 = arith.constant 0.000000e+00 : f32
    %22 = vector.broadcast %cst_15 : f32 to vector<8x32xf32>
    %c0_i32 = arith.constant 0 : i32
    %c8_i32 = arith.constant 8 : i32
    %23 = arith.muli %c0_i32, %c8_i32 : i32
    %24 = tpu.assume_multiple %23, 8 : i32
    %25 = arith.index_cast %24 : i32 to index
    %c0_16 = arith.constant 0 : index
    %26 = vector.load %arg8[%25, %c0_16] : memref<64x128xf32, #tpu.memory_space<vmem>>, vector<8x128xf32>
    %cst_17 = arith.constant dense<0.000000e+00> : vector<8x128xf32>
    %27 = tpu.matmul %21, %8, %cst_17 {dimension_numbers = #tpu.dot_dimension_numbers<[1], [0], [0], [1], [0, 0, 1, 1], [], []>} : vector<8x32xf32>, vector<32x128xf32>, vector<8x128xf32> -> vector<8x128xf32>
    %28 = arith.addf %26, %27 : vector<8x128xf32>
    %29 = arith.mulf %28, %17 : vector<8x128xf32>
    %30 = math.tanh %29 : vector<8x128xf32>
    %31 = arith.mulf %30, %17 : vector<8x128xf32>
    %32 = arith.addf %31, %20 : vector<8x128xf32>
    %33 = vector.extract_strided_slice %32 {offsets = [0, 0], sizes = [8, 32], strides = [1, 1]} : vector<8x128xf32> to vector<8x32xf32>
    %34 = vector.extract_strided_slice %32 {offsets = [0, 32], sizes = [8, 32], strides = [1, 1]} : vector<8x128xf32> to vector<8x32xf32>
    %35 = vector.extract_strided_slice %32 {offsets = [0, 64], sizes = [8, 32], strides = [1, 1]} : vector<8x128xf32> to vector<8x32xf32>
    %36 = vector.extract_strided_slice %32 {offsets = [0, 96], sizes = [8, 32], strides = [1, 1]} : vector<8x128xf32> to vector<8x32xf32>
    %37 = arith.mulf %34, %22 : vector<8x32xf32>
    %38 = arith.mulf %33, %35 : vector<8x32xf32>
    %39 = arith.addf %37, %38 : vector<8x32xf32>
    %40 = math.tanh %39 : vector<8x32xf32>
    %41 = arith.mulf %36, %40 : vector<8x32xf32>
    %42 = arith.index_cast %24 : i32 to index
    %c0_18 = arith.constant 0 : index
    %43 = vector.load %arg9[%42, %c0_18] : memref<64x32xf32, #tpu.memory_space<vmem>>, vector<8x32xf32>
    tpu.vector_store %arg9[%42, %c0_18], %41 {strides = array<i32>} : memref<64x32xf32, #tpu.memory_space<vmem>>, vector<8x32xf32>,
    %c1_i32 = arith.constant 1 : i32
    %c8_i32_19 = arith.constant 8 : i32
    %44 = arith.muli %c1_i32, %c8_i32_19 : i32
    %45 = tpu.assume_multiple %44, 8 : i32
    %46 = arith.index_cast %45 : i32 to index
    %c0_20 = arith.constant 0 : index
    %47 = vector.load %arg8[%46, %c0_20] : memref<64x128xf32, #tpu.memory_space<vmem>>, vector<8x128xf32>
    %cst_21 = arith.constant dense<0.000000e+00> : vector<8x128xf32>
    %48 = tpu.matmul %41, %8, %cst_21 {dimension_numbers = #tpu.dot_dimension_numbers<[1], [0], [0], [1], [0, 0, 1, 1], [], []>} : vector<8x32xf32>, vector<32x128xf32>, vector<8x128xf32> -> vector<8x128xf32>
    %49 = arith.addf %47, %48 : vector<8x128xf32>
    %50 = arith.mulf %49, %17 : vector<8x128xf32>
    %51 = math.tanh %50 : vector<8x128xf32>
    %52 = arith.mulf %51, %17 : vector<8x128xf32>
    %53 = arith.addf %52, %20 : vector<8x128xf32>
    %54 = vector.extract_strided_slice %53 {offsets = [0, 0], sizes = [8, 32], strides = [1, 1]} : vector<8x128xf32> to vector<8x32xf32>
    %55 = vector.extract_strided_slice %53 {offsets = [0, 32], sizes = [8, 32], strides = [1, 1]} : vector<8x128xf32> to vector<8x32xf32>
    %56 = vector.extract_strided_slice %53 {offsets = [0, 64], sizes = [8, 32], strides = [1, 1]} : vector<8x128xf32> to vector<8x32xf32>
    %57 = vector.extract_strided_slice %53 {offsets = [0, 96], sizes = [8, 32], strides = [1, 1]} : vector<8x128xf32> to vector<8x32xf32>
    %58 = arith.mulf %55, %39 : vector<8x32xf32>
    %59 = arith.mulf %54, %56 : vector<8x32xf32>
    %60 = arith.addf %58, %59 : vector<8x32xf32>
    %61 = math.tanh %60 : vector<8x32xf32>
    %62 = arith.mulf %57, %61 : vector<8x32xf32>
    %63 = arith.index_cast %45 : i32 to index
    %c0_22 = arith.constant 0 : index
    %64 = vector.load %arg9[%63, %c0_22] : memref<64x32xf32, #tpu.memory_space<vmem>>, vector<8x32xf32>
    tpu.vector_store %arg9[%63, %c0_22], %62 {strides = array<i32>} : memref<64x32xf32, #tpu.memory_space<vmem>>, vector<8x32xf32>,
    %c2_i32 = arith.constant 2 : i32
    %c8_i32_23 = arith.constant 8 : i32
    %65 = arith.muli %c2_i32, %c8_i32_23 : i32
    %66 = tpu.assume_multiple %65, 8 : i32
    %67 = arith.index_cast %66 : i32 to index
    %c0_24 = arith.constant 0 : index
    %68 = vector.load %arg8[%67, %c0_24] : memref<64x128xf32, #tpu.memory_space<vmem>>, vector<8x128xf32>
    %cst_25 = arith.constant dense<0.000000e+00> : vector<8x128xf32>
    %69 = tpu.matmul %62, %8, %cst_25 {dimension_numbers = #tpu.dot_dimension_numbers<[1], [0], [0], [1], [0, 0, 1, 1], [], []>} : vector<8x32xf32>, vector<32x128xf32>, vector<8x128xf32> -> vector<8x128xf32>
    %70 = arith.addf %68, %69 : vector<8x128xf32>
    %71 = arith.mulf %70, %17 : vector<8x128xf32>
    %72 = math.tanh %71 : vector<8x128xf32>
    %73 = arith.mulf %72, %17 : vector<8x128xf32>
    %74 = arith.addf %73, %20 : vector<8x128xf32>
    %75 = vector.extract_strided_slice %74 {offsets = [0, 0], sizes = [8, 32], strides = [1, 1]} : vector<8x128xf32> to vector<8x32xf32>
    %76 = vector.extract_strided_slice %74 {offsets = [0, 32], sizes = [8, 32], strides = [1, 1]} : vector<8x128xf32> to vector<8x32xf32>
    %77 = vector.extract_strided_slice %74 {offsets = [0, 64], sizes = [8, 32], strides = [1, 1]} : vector<8x128xf32> to vector<8x32xf32>
    %78 = vector.extract_strided_slice %74 {offsets = [0, 96], sizes = [8, 32], strides = [1, 1]} : vector<8x128xf32> to vector<8x32xf32>
    %79 = arith.mulf %76, %60 : vector<8x32xf32>
    %80 = arith.mulf %75, %77 : vector<8x32xf32>
    %81 = arith.addf %79, %80 : vector<8x32xf32>
    %82 = math.tanh %81 : vector<8x32xf32>
    %83 = arith.mulf %78, %82 : vector<8x32xf32>
    %84 = arith.index_cast %66 : i32 to index
    %c0_26 = arith.constant 0 : index
    %85 = vector.load %arg9[%84, %c0_26] : memref<64x32xf32, #tpu.memory_space<vmem>>, vector<8x32xf32>
    tpu.vector_store %arg9[%84, %c0_26], %83 {strides = array<i32>} : memref<64x32xf32, #tpu.memory_space<vmem>>, vector<8x32xf32>,
    %c3_i32 = arith.constant 3 : i32
    %c8_i32_27 = arith.constant 8 : i32
    %86 = arith.muli %c3_i32, %c8_i32_27 : i32
    %87 = tpu.assume_multiple %86, 8 : i32
    %88 = arith.index_cast %87 : i32 to index
    %c0_28 = arith.constant 0 : index
    %89 = vector.load %arg8[%88, %c0_28] : memref<64x128xf32, #tpu.memory_space<vmem>>, vector<8x128xf32>
    %cst_29 = arith.constant dense<0.000000e+00> : vector<8x128xf32>
    %90 = tpu.matmul %83, %8, %cst_29 {dimension_numbers = #tpu.dot_dimension_numbers<[1], [0], [0], [1], [0, 0, 1, 1], [], []>} : vector<8x32xf32>, vector<32x128xf32>, vector<8x128xf32> -> vector<8x128xf32>
    %91 = arith.addf %89, %90 : vector<8x128xf32>
    %92 = arith.mulf %91, %17 : vector<8x128xf32>
    %93 = math.tanh %92 : vector<8x128xf32>
    %94 = arith.mulf %93, %17 : vector<8x128xf32>
    %95 = arith.addf %94, %20 : vector<8x128xf32>
    %96 = vector.extract_strided_slice %95 {offsets = [0, 0], sizes = [8, 32], strides = [1, 1]} : vector<8x128xf32> to vector<8x32xf32>
    %97 = vector.extract_strided_slice %95 {offsets = [0, 32], sizes = [8, 32], strides = [1, 1]} : vector<8x128xf32> to vector<8x32xf32>
    %98 = vector.extract_strided_slice %95 {offsets = [0, 64], sizes = [8, 32], strides = [1, 1]} : vector<8x128xf32> to vector<8x32xf32>
    %99 = vector.extract_strided_slice %95 {offsets = [0, 96], sizes = [8, 32], strides = [1, 1]} : vector<8x128xf32> to vector<8x32xf32>
    %100 = arith.mulf %97, %81 : vector<8x32xf32>
    %101 = arith.mulf %96, %98 : vector<8x32xf32>
    %102 = arith.addf %100, %101 : vector<8x32xf32>
    %103 = math.tanh %102 : vector<8x32xf32>
    %104 = arith.mulf %99, %103 : vector<8x32xf32>
    %105 = arith.index_cast %87 : i32 to index
    %c0_30 = arith.constant 0 : index
    %106 = vector.load %arg9[%105, %c0_30] : memref<64x32xf32, #tpu.memory_space<vmem>>, vector<8x32xf32>
    tpu.vector_store %arg9[%105, %c0_30], %104 {strides = array<i32>} : memref<64x32xf32, #tpu.memory_space<vmem>>, vector<8x32xf32>,
    %c4_i32 = arith.constant 4 : i32
    %c8_i32_31 = arith.constant 8 : i32
    %107 = arith.muli %c4_i32, %c8_i32_31 : i32
    %108 = tpu.assume_multiple %107, 8 : i32
    %109 = arith.index_cast %108 : i32 to index
    %c0_32 = arith.constant 0 : index
    %110 = vector.load %arg8[%109, %c0_32] : memref<64x128xf32, #tpu.memory_space<vmem>>, vector<8x128xf32>
    %cst_33 = arith.constant dense<0.000000e+00> : vector<8x128xf32>
    %111 = tpu.matmul %104, %8, %cst_33 {dimension_numbers = #tpu.dot_dimension_numbers<[1], [0], [0], [1], [0, 0, 1, 1], [], []>} : vector<8x32xf32>, vector<32x128xf32>, vector<8x128xf32> -> vector<8x128xf32>
    %112 = arith.addf %110, %111 : vector<8x128xf32>
    %113 = arith.mulf %112, %17 : vector<8x128xf32>
    %114 = math.tanh %113 : vector<8x128xf32>
    %115 = arith.mulf %114, %17 : vector<8x128xf32>
    %116 = arith.addf %115, %20 : vector<8x128xf32>
    %117 = vector.extract_strided_slice %116 {offsets = [0, 0], sizes = [8, 32], strides = [1, 1]} : vector<8x128xf32> to vector<8x32xf32>
    %118 = vector.extract_strided_slice %116 {offsets = [0, 32], sizes = [8, 32], strides = [1, 1]} : vector<8x128xf32> to vector<8x32xf32>
    %119 = vector.extract_strided_slice %116 {offsets = [0, 64], sizes = [8, 32], strides = [1, 1]} : vector<8x128xf32> to vector<8x32xf32>
    %120 = vector.extract_strided_slice %116 {offsets = [0, 96], sizes = [8, 32], strides = [1, 1]} : vector<8x128xf32> to vector<8x32xf32>
    %121 = arith.mulf %118, %102 : vector<8x32xf32>
    %122 = arith.mulf %117, %119 : vector<8x32xf32>
    %123 = arith.addf %121, %122 : vector<8x32xf32>
    %124 = math.tanh %123 : vector<8x32xf32>
    %125 = arith.mulf %120, %124 : vector<8x32xf32>
    %126 = arith.index_cast %108 : i32 to index
    %c0_34 = arith.constant 0 : index
    %127 = vector.load %arg9[%126, %c0_34] : memref<64x32xf32, #tpu.memory_space<vmem>>, vector<8x32xf32>
    tpu.vector_store %arg9[%126, %c0_34], %125 {strides = array<i32>} : memref<64x32xf32, #tpu.memory_space<vmem>>, vector<8x32xf32>,
    %c5_i32 = arith.constant 5 : i32
    %c8_i32_35 = arith.constant 8 : i32
    %128 = arith.muli %c5_i32, %c8_i32_35 : i32
    %129 = tpu.assume_multiple %128, 8 : i32
    %130 = arith.index_cast %129 : i32 to index
    %c0_36 = arith.constant 0 : index
    %131 = vector.load %arg8[%130, %c0_36] : memref<64x128xf32, #tpu.memory_space<vmem>>, vector<8x128xf32>
    %cst_37 = arith.constant dense<0.000000e+00> : vector<8x128xf32>
    %132 = tpu.matmul %125, %8, %cst_37 {dimension_numbers = #tpu.dot_dimension_numbers<[1], [0], [0], [1], [0, 0, 1, 1], [], []>} : vector<8x32xf32>, vector<32x128xf32>, vector<8x128xf32> -> vector<8x128xf32>
    %133 = arith.addf %131, %132 : vector<8x128xf32>
    %134 = arith.mulf %133, %17 : vector<8x128xf32>
    %135 = math.tanh %134 : vector<8x128xf32>
    %136 = arith.mulf %135, %17 : vector<8x128xf32>
    %137 = arith.addf %136, %20 : vector<8x128xf32>
    %138 = vector.extract_strided_slice %137 {offsets = [0, 0], sizes = [8, 32], strides = [1, 1]} : vector<8x128xf32> to vector<8x32xf32>
    %139 = vector.extract_strided_slice %137 {offsets = [0, 32], sizes = [8, 32], strides = [1, 1]} : vector<8x128xf32> to vector<8x32xf32>
    %140 = vector.extract_strided_slice %137 {offsets = [0, 64], sizes = [8, 32], strides = [1, 1]} : vector<8x128xf32> to vector<8x32xf32>
    %141 = vector.extract_strided_slice %137 {offsets = [0, 96], sizes = [8, 32], strides = [1, 1]} : vector<8x128xf32> to vector<8x32xf32>
    %142 = arith.mulf %139, %123 : vector<8x32xf32>
    %143 = arith.mulf %138, %140 : vector<8x32xf32>
    %144 = arith.addf %142, %143 : vector<8x32xf32>
    %145 = math.tanh %144 : vector<8x32xf32>
    %146 = arith.mulf %141, %145 : vector<8x32xf32>
    %147 = arith.index_cast %129 : i32 to index
    %c0_38 = arith.constant 0 : index
    %148 = vector.load %arg9[%147, %c0_38] : memref<64x32xf32, #tpu.memory_space<vmem>>, vector<8x32xf32>
    tpu.vector_store %arg9[%147, %c0_38], %146 {strides = array<i32>} : memref<64x32xf32, #tpu.memory_space<vmem>>, vector<8x32xf32>,
    %c6_i32 = arith.constant 6 : i32
    %c8_i32_39 = arith.constant 8 : i32
    %149 = arith.muli %c6_i32, %c8_i32_39 : i32
    %150 = tpu.assume_multiple %149, 8 : i32
    %151 = arith.index_cast %150 : i32 to index
    %c0_40 = arith.constant 0 : index
    %152 = vector.load %arg8[%151, %c0_40] : memref<64x128xf32, #tpu.memory_space<vmem>>, vector<8x128xf32>
    %cst_41 = arith.constant dense<0.000000e+00> : vector<8x128xf32>
    %153 = tpu.matmul %146, %8, %cst_41 {dimension_numbers = #tpu.dot_dimension_numbers<[1], [0], [0], [1], [0, 0, 1, 1], [], []>} : vector<8x32xf32>, vector<32x128xf32>, vector<8x128xf32> -> vector<8x128xf32>
    %154 = arith.addf %152, %153 : vector<8x128xf32>
    %155 = arith.mulf %154, %17 : vector<8x128xf32>
    %156 = math.tanh %155 : vector<8x128xf32>
    %157 = arith.mulf %156, %17 : vector<8x128xf32>
    %158 = arith.addf %157, %20 : vector<8x128xf32>
    %159 = vector.extract_strided_slice %158 {offsets = [0, 0], sizes = [8, 32], strides = [1, 1]} : vector<8x128xf32> to vector<8x32xf32>
    %160 = vector.extract_strided_slice %158 {offsets = [0, 32], sizes = [8, 32], strides = [1, 1]} : vector<8x128xf32> to vector<8x32xf32>
    %161 = vector.extract_strided_slice %158 {offsets = [0, 64], sizes = [8, 32], strides = [1, 1]} : vector<8x128xf32> to vector<8x32xf32>
    %162 = vector.extract_strided_slice %158 {offsets = [0, 96], sizes = [8, 32], strides = [1, 1]} : vector<8x128xf32> to vector<8x32xf32>
    %163 = arith.mulf %160, %144 : vector<8x32xf32>
    %164 = arith.mulf %159, %161 : vector<8x32xf32>
    %165 = arith.addf %163, %164 : vector<8x32xf32>
    %166 = math.tanh %165 : vector<8x32xf32>
    %167 = arith.mulf %162, %166 : vector<8x32xf32>
    %168 = arith.index_cast %150 : i32 to index
    %c0_42 = arith.constant 0 : index
    %169 = vector.load %arg9[%168, %c0_42] : memref<64x32xf32, #tpu.memory_space<vmem>>, vector<8x32xf32>
    tpu.vector_store %arg9[%168, %c0_42], %167 {strides = array<i32>} : memref<64x32xf32, #tpu.memory_space<vmem>>, vector<8x32xf32>,
    %c7_i32 = arith.constant 7 : i32
    %c8_i32_43 = arith.constant 8 : i32
    %170 = arith.muli %c7_i32, %c8_i32_43 : i32
    %171 = tpu.assume_multiple %170, 8 : i32
    %172 = arith.index_cast %171 : i32 to index
    %c0_44 = arith.constant 0 : index
    %173 = vector.load %arg8[%172, %c0_44] : memref<64x128xf32, #tpu.memory_space<vmem>>, vector<8x128xf32>
    %cst_45 = arith.constant dense<0.000000e+00> : vector<8x128xf32>
    %174 = tpu.matmul %167, %8, %cst_45 {dimension_numbers = #tpu.dot_dimension_numbers<[1], [0], [0], [1], [0, 0, 1, 1], [], []>} : vector<8x32xf32>, vector<32x128xf32>, vector<8x128xf32> -> vector<8x128xf32>
    %175 = arith.addf %173, %174 : vector<8x128xf32>
    %176 = arith.mulf %175, %17 : vector<8x128xf32>
    %177 = math.tanh %176 : vector<8x128xf32>
    %178 = arith.mulf %177, %17 : vector<8x128xf32>
    %179 = arith.addf %178, %20 : vector<8x128xf32>
    %180 = vector.extract_strided_slice %179 {offsets = [0, 0], sizes = [8, 32], strides = [1, 1]} : vector<8x128xf32> to vector<8x32xf32>
    %181 = vector.extract_strided_slice %179 {offsets = [0, 32], sizes = [8, 32], strides = [1, 1]} : vector<8x128xf32> to vector<8x32xf32>
    %182 = vector.extract_strided_slice %179 {offsets = [0, 64], sizes = [8, 32], strides = [1, 1]} : vector<8x128xf32> to vector<8x32xf32>
    %183 = vector.extract_strided_slice %179 {offsets = [0, 96], sizes = [8, 32], strides = [1, 1]} : vector<8x128xf32> to vector<8x32xf32>
    %184 = arith.mulf %181, %165 : vector<8x32xf32>
    %185 = arith.mulf %180, %182 : vector<8x32xf32>
    %186 = arith.addf %184, %185 : vector<8x32xf32>
    %187 = math.tanh %186 : vector<8x32xf32>
    %188 = arith.mulf %183, %187 : vector<8x32xf32>
    %189 = arith.index_cast %171 : i32 to index
    %c0_46 = arith.constant 0 : index
    %190 = vector.load %arg9[%189, %c0_46] : memref<64x32xf32, #tpu.memory_space<vmem>>, vector<8x32xf32>
    tpu.vector_store %arg9[%189, %c0_46], %188 {strides = array<i32>} : memref<64x32xf32, #tpu.memory_space<vmem>>, vector<8x32xf32>,
    %c8_i32_47 = arith.constant 8 : i32
    %c0_48 = arith.constant 0 : index
    %c0_49 = arith.constant 0 : index
    %191 = vector.load %arg9[%c0_48, %c0_49] : memref<64x32xf32, #tpu.memory_space<vmem>>, vector<64x32xf32>
    %c0_50 = arith.constant 0 : index
    %c0_51 = arith.constant 0 : index
    %192 = vector.load %arg5[%c0_50, %c0_51] : memref<32x128xf32, #tpu.memory_space<vmem>>, vector<32x128xf32>
    %cst_52 = arith.constant dense<0.000000e+00> : vector<64x128xf32>
    %193 = tpu.matmul %191, %192, %cst_52 {dimension_numbers = #tpu.dot_dimension_numbers<[1], [0], [0], [1], [0, 0, 1, 1], [], []>} : vector<64x32xf32>, vector<32x128xf32>, vector<64x128xf32> -> vector<64x128xf32>
    %c0_53 = arith.constant 0 : index
    %c0_54 = arith.constant 0 : index
    %194 = vector.load %arg6[%c0_53, %c0_54] : memref<1x128xf32, #tpu.memory_space<vmem>>, vector<1x128xf32>
    %195 = vector.broadcast %194 : vector<1x128xf32> to vector<64x128xf32>
    %196 = arith.addf %193, %195 : vector<64x128xf32>
    %c0_55 = arith.constant 0 : index
    %c0_56 = arith.constant 0 : index
    %c0_57 = arith.constant 0 : index
    %197 = vector.load %arg7[%c0_55, %c0_56, %c0_57] : memref<1x64x128xf32, #tpu.memory_space<vmem>>, vector<1x64x128xf32>
    %198 = vector.shape_cast %197 : vector<1x64x128xf32> to vector<64x128xf32>
    %199 = vector.shape_cast %196 : vector<64x128xf32> to vector<1x64x128xf32>
    tpu.vector_store %arg7[%c0_55, %c0_56, %c0_57], %199 {strides = array<i32>} : memref<1x64x128xf32, #tpu.memory_space<vmem>>, vector<1x64x128xf32>,
    return
  }
  func.func @transform_0(%arg0: i32) -> (i32, i32, i32) {
    %c0_i32 = arith.constant 0 : i32
    %c0_i32_0 = arith.constant 0 : i32
    %c0_i32_1 = arith.constant 0 : i32
    return %arg0, %c0_i32, %c0_i32_0 : i32, i32, i32
  }
  func.func @transform_1(%arg0: i32) -> (i32, i32) {
    %c0_i32 = arith.constant 0 : i32
    %c0_i32_0 = arith.constant 0 : i32
    %c0_i32_1 = arith.constant 0 : i32
    return %c0_i32, %c0_i32_0 : i32, i32
  }
  func.func @transform_2(%arg0: i32) -> (i32, i32) {
    %c0_i32 = arith.constant 0 : i32
    %c0_i32_0 = arith.constant 0 : i32
    %c0_i32_1 = arith.constant 0 : i32
    return %c0_i32, %c0_i32_0 : i32, i32
  }
  func.func @transform_3(%arg0: i32) -> (i32, i32) {
    %c0_i32 = arith.constant 0 : i32
    %c0_i32_0 = arith.constant 0 : i32
    %c0_i32_1 = arith.constant 0 : i32
    return %c0_i32, %c0_i32_0 : i32, i32
  }
  func.func @transform_4(%arg0: i32) -> (i32, i32) {
    %c0_i32 = arith.constant 0 : i32
    %c0_i32_0 = arith.constant 0 : i32
    %c0_i32_1 = arith.constant 0 : i32
    return %c0_i32, %c0_i32_0 : i32, i32
  }
  func.func @transform_5(%arg0: i32) -> (i32, i32) {
    %c0_i32 = arith.constant 0 : i32
    %c0_i32_0 = arith.constant 0 : i32
    %c0_i32_1 = arith.constant 0 : i32
    return %c0_i32, %c0_i32_0 : i32, i32
  }
  func.func @transform_6(%arg0: i32) -> (i32, i32, i32) {
    %c0_i32 = arith.constant 0 : i32
    %c0_i32_0 = arith.constant 0 : i32
    %c0_i32_1 = arith.constant 0 : i32
    return %arg0, %c0_i32, %c0_i32_0 : i32, i32, i32
  }
}

</mosaic_0001>

<llo_original>
// kernel: tpu_custom_call.1
$region0: #{tpu_custom_call.1}
  #allocation0 [shape = 'u32[]', space=smem, size = 0x4, offset = 0x4, fixed_abs, tag = 'smem constant byte address 0x4 - core index']
  #allocation1 [shape = 'u32[72,128]{1,0:T(1,128)}', space=vmem, size = 0x9000, scoped, tag = 'internal scratch']
  #allocation2 [shape = 'f32[64,128]{1,0:T(8,128)}', space=vmem, size = 0x8000, scoped, tag = 'scratch operand']
  #allocation3 [shape = 'f32[64,32]{1,0:T(8,128)}', space=vmem, size = 0x8000, scoped, tag = 'scratch operand']
  %s0 = inlined_call_operand.vmem [shape: f32[1,64,16], index: 0, kind: input, shape index: {}]
  %s1 = inlined_call_operand.vmem [shape: f32[16,128], index: 1, kind: input, shape index: {}]
  %s2 = inlined_call_operand.vmem [shape: f32[32,128], index: 2, kind: input, shape index: {}]
  %s3 = inlined_call_operand.vmem [shape: f32[1,128], index: 3, kind: input, shape index: {}]
  %s4 = inlined_call_operand.vmem [shape: f32[32,128], index: 4, kind: input, shape index: {}]
  %s5 = inlined_call_operand.vmem [shape: f32[1,128], index: 5, kind: input, shape index: {}]
  %s6 = inlined_call_operand.hbm [shape: f32[1,64,128], index: 6, kind: output, shape index: {}]
  %s7 = sld [smem:[#allocation0]]
  $region34: #{tpu_custom_call.1} parent=0
    _
  %s9 = ssub.s32 1, %s7
  %s10 = scalar_select 0, %s9, %s7
  $region1: #{tpu_custom_call.1} parent=0
    #allocation4 [shape = 'u8[32768]{0}', space=vmem, size = 0x8000, scoped, tag = 'output window, operand 0, single buffered']
    #allocation5 [shape = 's32[1]{0}', space=sflag, size = 0x4, scoped, tag = 'scoped memory for tpu_custom_call.1']
    %11 = vsyncpa [#allocation5], 0
    // Predicated region
    $region2: #{tpu_custom_call.1} parent=1 // pred_check
      _
    $region3: #{tpu_custom_call.1} parent=1 // pred_check_branch
      %13 = sbr.rel (0) target = $region5
    $region4: #{tpu_custom_call.1} parent=1 // pred_region
      _
    $region5: #{tpu_custom_call.1} parent=1 // pred_fallthru
      _
    // Predicated region
    $region6: #{tpu_custom_call.1} parent=1 // pred_check
      _
    $region7: #{tpu_custom_call.1} parent=1 // pred_check_branch
      %15 = sbr.rel (0) target = $region9
    $region8: #{tpu_custom_call.1} parent=1 // pred_region
      _
    $region9: #{tpu_custom_call.1} parent=1 // pred_fallthru
      _
    // Predicated region
    $region10: #{tpu_custom_call.1} parent=1 // pred_check
      _
    $region11: #{tpu_custom_call.1} parent=1 // pred_check_branch
      %17 = sbr.rel (0) target = $region13
    $region12: #{tpu_custom_call.1} parent=1 // pred_region
      _
    $region13: #{tpu_custom_call.1} parent=1 // pred_fallthru
      _
    // Predicated region
    $region14: #{tpu_custom_call.1} parent=1 // pred_check
      _
    $region15: #{tpu_custom_call.1} parent=1 // pred_check_branch
      %19 = sbr.rel (0) target = $region17
    $region16: #{tpu_custom_call.1} parent=1 // pred_region
      _
    $region17: #{tpu_custom_call.1} parent=1 // pred_fallthru
      _
    // Predicated region
    $region18: #{tpu_custom_call.1} parent=1 // pred_check
      _
    $region19: #{tpu_custom_call.1} parent=1 // pred_check_branch
      %21 = sbr.rel (0) target = $region21
    $region20: #{tpu_custom_call.1} parent=1 // pred_region
      _
    $region21: #{tpu_custom_call.1} parent=1 // pred_fallthru
      _
    // Predicated region
    $region22: #{tpu_custom_call.1} parent=1 // pred_check
      _
    $region23: #{tpu_custom_call.1} parent=1 // pred_check_branch
      %23 = sbr.rel (0) target = $region25
    $region24: #{tpu_custom_call.1} parent=1 // pred_region
      _
    $region25: #{tpu_custom_call.1} parent=1 // pred_fallthru
      _
    %v24 = vld [vmem:[%s0] sm:$0xff]
    %v25 = vld [vmem:[%s0 + $0x8] sm:$0xff]
    %v26 = vld [vmem:[%s0 + $0x10] sm:$0xff]
    %v27 = vld [vmem:[%s0 + $0x18] sm:$0xff]
    %v28 = vld [vmem:[%s0 + $0x20] sm:$0xff]
    %v29 = vld [vmem:[%s0 + $0x28] sm:$0xff]
    %v30 = vld [vmem:[%s0 + $0x30] sm:$0xff]
    %v31 = vld [vmem:[%s0 + $0x38] sm:$0xff]
    %v32 = vld [vmem:[%s1] sm:$0xff]
    %v33 = vld [vmem:[%s1 + $0x8] sm:$0xff]
    %v34 = vld [vmem:[%s3] sm:$0x1]
    %v36 = vperm.slane %v34, 0
    %vm38 = vcmask 130048
    %v40 = vsel %vm38, %v24, 0
    %v43 = vsel %vm38, %v25, 0
    %v46 = vsel %vm38, %v26, 0
    %v49 = vsel %vm38, %v27, 0
    %v52 = vsel %vm38, %v28, 0
    %v55 = vsel %vm38, %v29, 0
    %v58 = vsel %vm38, %v30, 0
    %v61 = vsel %vm38, %v31, 0
    %63 = vmatpush.msra.mxu0 0.0
    %64 = vmatpush.msra.mxu0 0.0
    %65 = vmatpush.msra.mxu0 0.0
    %66 = vmatpush.msra.mxu0 0.0
    %67 = vmatpush.msra.mxu0 0.0
    %68 = vmatpush.msra.mxu0 0.0
    %69 = vmatpush.msra.mxu0 0.0
    %70 = vmatpush.msra.mxu0 0.0
    %71 = vmatpush.msra.mxu0 0.0
    %72 = vmatpush.msra.mxu0 0.0
    %73 = vmatpush.msra.mxu0 0.0
    %74 = vmatpush.msra.mxu0 0.0
    %75 = vmatpush.msra.mxu0 0.0
    %76 = vmatpush.msra.mxu0 0.0
    %77 = vmatpush.msra.mxu0 %v33
    %78 = vmatpush.msra.mxu0 %v32
    %79 = vmatmul.f32.gmra.mxu0 %v40
    %v80 = vpop.f32.mrf.mxu0
    %v81 = vadd.f32 %v36, %v80
    %82 = vmatmul.f32.gmra.mxu0 %v43
    %v83 = vpop.f32.mrf.mxu0
    %v84 = vadd.f32 %v36, %v83
    %85 = vmatmul.f32.gmra.mxu0 %v46
    %v86 = vpop.f32.mrf.mxu0
    %v87 = vadd.f32 %v36, %v86
    %88 = vmatmul.f32.gmra.mxu0 %v49
    %v89 = vpop.f32.mrf.mxu0
    %v90 = vadd.f32 %v36, %v89
    %91 = vmatmul.f32.gmra.mxu0 %v52
    %v92 = vpop.f32.mrf.mxu0
    %v93 = vadd.f32 %v36, %v92
    %94 = vmatmul.f32.gmra.mxu0 %v55
    %v95 = vpop.f32.mrf.mxu0
    %v96 = vadd.f32 %v36, %v95
    %97 = vmatmul.f32.gmra.mxu0 %v58
    %v98 = vpop.f32.mrf.mxu0
    %v99 = vadd.f32 %v36, %v98
    %100 = vmatmul.f32.gmra.mxu0 %v61
    %v101 = vpop.f32.mrf.mxu0
    %v102 = vadd.f32 %v36, %v101
    %103 = vdwg.mxu0
    %104 = vst [vmem:[#allocation2] sm:$0xff] %v81
    %105 = vst [vmem:[#allocation2 + $0x8] sm:$0xff] %v84
    %106 = vst [vmem:[#allocation2 + $0x10] sm:$0xff] %v87
    %107 = vst [vmem:[#allocation2 + $0x18] sm:$0xff] %v90
    %108 = vst [vmem:[#allocation2 + $0x20] sm:$0xff] %v93
    %109 = vst [vmem:[#allocation2 + $0x28] sm:$0xff] %v96
    %110 = vst [vmem:[#allocation2 + $0x30] sm:$0xff] %v99
    %111 = vst [vmem:[#allocation2 + $0x38] sm:$0xff] %v102
    %v112 = vld [vmem:[%s2] sm:$0xff]
    %v113 = vld [vmem:[%s2 + $0x8] sm:$0xff]
    %v114 = vld [vmem:[%s2 + $0x10] sm:$0xff]
    %v115 = vld [vmem:[%s2 + $0x18] sm:$0xff]
    %v116 = vlaneseq
    %v117 = vand.u32 %v116, 127
    %vm118 = vcmp.ge.s32.totalorder %v117, 64
    %vm119 = vcmp.lt.s32.totalorder %v117, 96
    %vm120 = vmand %vm118, %vm119
    %v121 = vsel %vm120, 1.0, 0.5
    %v122 = vsel %vm120, 0.0, 0.5
    %v123 = vld [vmem:[#allocation2] sm:$0xff]
    %vm124 = vcmask 261120
    %v126 = vsel %vm124, 0.0, 0
    %128 = vmatpush.msra.mxu0 0.0
    %129 = vmatpush.msra.mxu0 0.0
    %130 = vmatpush.msra.mxu0 0.0
    %131 = vmatpush.msra.mxu0 0.0
    %132 = vmatpush.msra.mxu0 0.0
    %133 = vmatpush.msra.mxu0 0.0
    %134 = vmatpush.msra.mxu0 0.0
    %135 = vmatpush.msra.mxu0 0.0
    %136 = vmatpush.msra.mxu0 0.0
    %137 = vmatpush.msra.mxu0 0.0
    %138 = vmatpush.msra.mxu0 0.0
    %139 = vmatpush.msra.mxu0 0.0
    %140 = vmatpush.msra.mxu0 %v115
    %141 = vmatpush.msra.mxu0 %v114
    %142 = vmatpush.msra.mxu0 %v113
    %143 = vmatpush.msra.mxu0 %v112
    %144 = vmatmul.f32.gmra.mxu0 %v126
    %v145 = vpop.f32.mrf.mxu0
    %v146 = vadd.f32 0.0, %v145
    %147 = vdwg.mxu0
    %v148 = vadd.f32 %v123, %v146
    %v149 = vmul.f32 %v148, %v121
    %v150 = vtanh.pop %v149
    %v151 = vmul.f32 %v150, %v121
    %v152 = vadd.f32 %v151, %v122
    %v153 = vmul.f32 %v152, 0.0
    %155 = vrot.lane.b32.xlu0 %v152, 64
    %v156 = vpop.permute.xlu0 %155
    %v158 = vmul.f32 %v152, %v156
    %160 = vrot.lane.b32.xlu0 %v158, 32
    %v161 = vpop.permute.xlu0 %160
    %v163 = vadd.f32 %v153, %v161
    %v164 = vtanh.pop %v163
    %166 = vrot.lane.b32.xlu0 %v164, 64
    %v167 = vpop.permute.xlu0 %166
    %v169 = vmul.f32 %v152, %v167
    %171 = vrot.lane.b32.xlu0 %v169, 32
    %v172 = vpop.permute.xlu0 %171
    %174 = vst.msk [vmem:[#allocation3] sm:$0xff] %vm124, %v172
    %s175 = scalar_lea.vmem [#allocation2], 8
    %v176 = vld [vmem:[%s175] sm:$0xff]
    %v177 = vsel %vm124, %v172, 0
    %179 = vmatpush.msra.mxu0 0.0
    %180 = vmatpush.msra.mxu0 0.0
    %181 = vmatpush.msra.mxu0 0.0
    %182 = vmatpush.msra.mxu0 0.0
    %183 = vmatpush.msra.mxu0 0.0
    %184 = vmatpush.msra.mxu0 0.0
    %185 = vmatpush.msra.mxu0 0.0
    %186 = vmatpush.msra.mxu0 0.0
    %187 = vmatpush.msra.mxu0 0.0
    %188 = vmatpush.msra.mxu0 0.0
    %189 = vmatpush.msra.mxu0 0.0
    %190 = vmatpush.msra.mxu0 0.0
    %191 = vmatpush.msra.mxu0 %v115
    %192 = vmatpush.msra.mxu0 %v114
    %193 = vmatpush.msra.mxu0 %v113
    %194 = vmatpush.msra.mxu0 %v112
    %195 = vmatmul.f32.gmra.mxu0 %v177
    %v196 = vpop.f32.mrf.mxu0
    %v197 = vadd.f32 0.0, %v196
    %198 = vdwg.mxu0
    %v199 = vadd.f32 %v176, %v197
    %v200 = vmul.f32 %v199, %v121
    %v201 = vtanh.pop %v200
    %v202 = vmul.f32 %v201, %v121
    %v203 = vadd.f32 %v202, %v122
    %v204 = vmul.f32 %v203, %v163
    %206 = vrot.lane.b32.xlu0 %v203, 64
    %v207 = vpop.permute.xlu0 %206
    %v209 = vmul.f32 %v203, %v207
    %211 = vrot.lane.b32.xlu0 %v209, 32
    %v212 = vpop.permute.xlu0 %211
    %v214 = vadd.f32 %v204, %v212
    %v215 = vtanh.pop %v214
    %217 = vrot.lane.b32.xlu0 %v215, 64
    %v218 = vpop.permute.xlu0 %217
    %v220 = vmul.f32 %v203, %v218
    %222 = vrot.lane.b32.xlu0 %v220, 32
    %v223 = vpop.permute.xlu0 %222
    %s225 = scalar_lea.vmem [#allocation3], 8
    %226 = vst.msk [vmem:[%s225] sm:$0xff] %vm124, %v223
    %s227 = scalar_lea.vmem [#allocation2], 16
    %v228 = vld [vmem:[%s227] sm:$0xff]
    %v229 = vsel %vm124, %v223, 0
    %231 = vmatpush.msra.mxu0 0.0
    %232 = vmatpush.msra.mxu0 0.0
    %233 = vmatpush.msra.mxu0 0.0
    %234 = vmatpush.msra.mxu0 0.0
    %235 = vmatpush.msra.mxu0 0.0
    %236 = vmatpush.msra.mxu0 0.0
    %237 = vmatpush.msra.mxu0 0.0
    %238 = vmatpush.msra.mxu0 0.0
    %239 = vmatpush.msra.mxu0 0.0
    %240 = vmatpush.msra.mxu0 0.0
    %241 = vmatpush.msra.mxu0 0.0
    %242 = vmatpush.msra.mxu0 0.0
    %243 = vmatpush.msra.mxu0 %v115
    %244 = vmatpush.msra.mxu0 %v114
    %245 = vmatpush.msra.mxu0 %v113
    %246 = vmatpush.msra.mxu0 %v112
    %247 = vmatmul.f32.gmra.mxu0 %v229
    %v248 = vpop.f32.mrf.mxu0
    %v249 = vadd.f32 0.0, %v248
    %250 = vdwg.mxu0
    %v251 = vadd.f32 %v228, %v249
    %v252 = vmul.f32 %v251, %v121
    %v253 = vtanh.pop %v252
    %v254 = vmul.f32 %v253, %v121
    %v255 = vadd.f32 %v254, %v122
    %v256 = vmul.f32 %v255, %v214
    %258 = vrot.lane.b32.xlu0 %v255, 64
    %v259 = vpop.permute.xlu0 %258
    %v261 = vmul.f32 %v255, %v259
    %263 = vrot.lane.b32.xlu0 %v261, 32
    %v264 = vpop.permute.xlu0 %263
    %v266 = vadd.f32 %v256, %v264
    %v267 = vtanh.pop %v266
    %269 = vrot.lane.b32.xlu0 %v267, 64
    %v270 = vpop.permute.xlu0 %269
    %v272 = vmul.f32 %v255, %v270
    %274 = vrot.lane.b32.xlu0 %v272, 32
    %v275 = vpop.permute.xlu0 %274
    %s277 = scalar_lea.vmem [#allocation3], 16
    %278 = vst.msk [vmem:[%s277] sm:$0xff] %vm124, %v275
    %s279 = scalar_lea.vmem [#allocation2], 24
    %v280 = vld [vmem:[%s279] sm:$0xff]
    %v281 = vsel %vm124, %v275, 0
    %283 = vmatpush.msra.mxu0 0.0
    %284 = vmatpush.msra.mxu0 0.0
    %285 = vmatpush.msra.mxu0 0.0
    %286 = vmatpush.msra.mxu0 0.0
    %287 = vmatpush.msra.mxu0 0.0
    %288 = vmatpush.msra.mxu0 0.0
    %289 = vmatpush.msra.mxu0 0.0
    %290 = vmatpush.msra.mxu0 0.0
    %291 = vmatpush.msra.mxu0 0.0
    %292 = vmatpush.msra.mxu0 0.0
    %293 = vmatpush.msra.mxu0 0.0
    %294 = vmatpush.msra.mxu0 0.0
    %295 = vmatpush.msra.mxu0 %v115
    %296 = vmatpush.msra.mxu0 %v114
    %297 = vmatpush.msra.mxu0 %v113
    %298 = vmatpush.msra.mxu0 %v112
    %299 = vmatmul.f32.gmra.mxu0 %v281
    %v300 = vpop.f32.mrf.mxu0
    %v301 = vadd.f32 0.0, %v300
    %302 = vdwg.mxu0
    %v303 = vadd.f32 %v280, %v301
    %v304 = vmul.f32 %v303, %v121
    %v305 = vtanh.pop %v304
    %v306 = vmul.f32 %v305, %v121
    %v307 = vadd.f32 %v306, %v122
    %v308 = vmul.f32 %v307, %v266
    %310 = vrot.lane.b32.xlu0 %v307, 64
    %v311 = vpop.permute.xlu0 %310
    %v313 = vmul.f32 %v307, %v311
    %315 = vrot.lane.b32.xlu0 %v313, 32
    %v316 = vpop.permute.xlu0 %315
    %v318 = vadd.f32 %v308, %v316
    %v319 = vtanh.pop %v318
    %321 = vrot.lane.b32.xlu0 %v319, 64
    %v322 = vpop.permute.xlu0 %321
    %v324 = vmul.f32 %v307, %v322
    %326 = vrot.lane.b32.xlu0 %v324, 32
    %v327 = vpop.permute.xlu0 %326
    %s329 = scalar_lea.vmem [#allocation3], 24
    %330 = vst.msk [vmem:[%s329] sm:$0xff] %vm124, %v327
    %s331 = scalar_lea.vmem [#allocation2], 32
    %v332 = vld [vmem:[%s331] sm:$0xff]
    %v333 = vsel %vm124, %v327, 0
    %335 = vmatpush.msra.mxu0 0.0
    %336 = vmatpush.msra.mxu0 0.0
    %337 = vmatpush.msra.mxu0 0.0
    %338 = vmatpush.msra.mxu0 0.0
    %339 = vmatpush.msra.mxu0 0.0
    %340 = vmatpush.msra.mxu0 0.0
    %341 = vmatpush.msra.mxu0 0.0
    %342 = vmatpush.msra.mxu0 0.0
    %343 = vmatpush.msra.mxu0 0.0
    %344 = vmatpush.msra.mxu0 0.0
    %345 = vmatpush.msra.mxu0 0.0
    %346 = vmatpush.msra.mxu0 0.0
    %347 = vmatpush.msra.mxu0 %v115
    %348 = vmatpush.msra.mxu0 %v114
    %349 = vmatpush.msra.mxu0 %v113
    %350 = vmatpush.msra.mxu0 %v112
    %351 = vmatmul.f32.gmra.mxu0 %v333
    %v352 = vpop.f32.mrf.mxu0
    %v353 = vadd.f32 0.0, %v352
    %354 = vdwg.mxu0
    %v355 = vadd.f32 %v332, %v353
    %v356 = vmul.f32 %v355, %v121
    %v357 = vtanh.pop %v356
    %v358 = vmul.f32 %v357, %v121
    %v359 = vadd.f32 %v358, %v122
    %v360 = vmul.f32 %v359, %v318
    %362 = vrot.lane.b32.xlu0 %v359, 64
    %v363 = vpop.permute.xlu0 %362
    %v365 = vmul.f32 %v359, %v363
    %367 = vrot.lane.b32.xlu0 %v365, 32
    %v368 = vpop.permute.xlu0 %367
    %v370 = vadd.f32 %v360, %v368
    %v371 = vtanh.pop %v370
    %373 = vrot.lane.b32.xlu0 %v371, 64
    %v374 = vpop.permute.xlu0 %373
    %v376 = vmul.f32 %v359, %v374
    %378 = vrot.lane.b32.xlu0 %v376, 32
    %v379 = vpop.permute.xlu0 %378
    %s381 = scalar_lea.vmem [#allocation3], 32
    %382 = vst.msk [vmem:[%s381] sm:$0xff] %vm124, %v379
    %s383 = scalar_lea.vmem [#allocation2], 40
    %v384 = vld [vmem:[%s383] sm:$0xff]
    %v385 = vsel %vm124, %v379, 0
    %387 = vmatpush.msra.mxu0 0.0
    %388 = vmatpush.msra.mxu0 0.0
    %389 = vmatpush.msra.mxu0 0.0
    %390 = vmatpush.msra.mxu0 0.0
    %391 = vmatpush.msra.mxu0 0.0
    %392 = vmatpush.msra.mxu0 0.0
    %393 = vmatpush.msra.mxu0 0.0
    %394 = vmatpush.msra.mxu0 0.0
    %395 = vmatpush.msra.mxu0 0.0
    %396 = vmatpush.msra.mxu0 0.0
    %397 = vmatpush.msra.mxu0 0.0
    %398 = vmatpush.msra.mxu0 0.0
    %399 = vmatpush.msra.mxu0 %v115
    %400 = vmatpush.msra.mxu0 %v114
    %401 = vmatpush.msra.mxu0 %v113
    %402 = vmatpush.msra.mxu0 %v112
    %403 = vmatmul.f32.gmra.mxu0 %v385
    %v404 = vpop.f32.mrf.mxu0
    %v405 = vadd.f32 0.0, %v404
    %406 = vdwg.mxu0
    %v407 = vadd.f32 %v384, %v405
    %v408 = vmul.f32 %v407, %v121
    %v409 = vtanh.pop %v408
    %v410 = vmul.f32 %v409, %v121
    %v411 = vadd.f32 %v410, %v122
    %v412 = vmul.f32 %v411, %v370
    %414 = vrot.lane.b32.xlu0 %v411, 64
    %v415 = vpop.permute.xlu0 %414
    %v417 = vmul.f32 %v411, %v415
    %419 = vrot.lane.b32.xlu0 %v417, 32
    %v420 = vpop.permute.xlu0 %419
    %v422 = vadd.f32 %v412, %v420
    %v423 = vtanh.pop %v422
    %425 = vrot.lane.b32.xlu0 %v423, 64
    %v426 = vpop.permute.xlu0 %425
    %v428 = vmul.f32 %v411, %v426
    %430 = vrot.lane.b32.xlu0 %v428, 32
    %v431 = vpop.permute.xlu0 %430
    %s433 = scalar_lea.vmem [#allocation3], 40
    %434 = vst.msk [vmem:[%s433] sm:$0xff] %vm124, %v431
    %s435 = scalar_lea.vmem [#allocation2], 48
    %v436 = vld [vmem:[%s435] sm:$0xff]
    %v437 = vsel %vm124, %v431, 0
    %439 = vmatpush.msra.mxu0 0.0
    %440 = vmatpush.msra.mxu0 0.0
    %441 = vmatpush.msra.mxu0 0.0
    %442 = vmatpush.msra.mxu0 0.0
    %443 = vmatpush.msra.mxu0 0.0
    %444 = vmatpush.msra.mxu0 0.0
    %445 = vmatpush.msra.mxu0 0.0
    %446 = vmatpush.msra.mxu0 0.0
    %447 = vmatpush.msra.mxu0 0.0
    %448 = vmatpush.msra.mxu0 0.0
    %449 = vmatpush.msra.mxu0 0.0
    %450 = vmatpush.msra.mxu0 0.0
    %451 = vmatpush.msra.mxu0 %v115
    %452 = vmatpush.msra.mxu0 %v114
    %453 = vmatpush.msra.mxu0 %v113
    %454 = vmatpush.msra.mxu0 %v112
    %455 = vmatmul.f32.gmra.mxu0 %v437
    %v456 = vpop.f32.mrf.mxu0
    %v457 = vadd.f32 0.0, %v456
    %458 = vdwg.mxu0
    %v459 = vadd.f32 %v436, %v457
    %v460 = vmul.f32 %v459, %v121
    %v461 = vtanh.pop %v460
    %v462 = vmul.f32 %v461, %v121
    %v463 = vadd.f32 %v462, %v122
    %v464 = vmul.f32 %v463, %v422
    %466 = vrot.lane.b32.xlu0 %v463, 64
    %v467 = vpop.permute.xlu0 %466
    %v469 = vmul.f32 %v463, %v467
    %471 = vrot.lane.b32.xlu0 %v469, 32
    %v472 = vpop.permute.xlu0 %471
    %v474 = vadd.f32 %v464, %v472
    %v475 = vtanh.pop %v474
    %477 = vrot.lane.b32.xlu0 %v475, 64
    %v478 = vpop.permute.xlu0 %477
    %v480 = vmul.f32 %v463, %v478
    %482 = vrot.lane.b32.xlu0 %v480, 32
    %v483 = vpop.permute.xlu0 %482
    %s485 = scalar_lea.vmem [#allocation3], 48
    %486 = vst.msk [vmem:[%s485] sm:$0xff] %vm124, %v483
    %s487 = scalar_lea.vmem [#allocation2], 56
    %v488 = vld [vmem:[%s487] sm:$0xff]
    %v489 = vsel %vm124, %v483, 0
    %491 = vmatpush.msra.mxu0 0.0
    %492 = vmatpush.msra.mxu0 0.0
    %493 = vmatpush.msra.mxu0 0.0
    %494 = vmatpush.msra.mxu0 0.0
    %495 = vmatpush.msra.mxu0 0.0
    %496 = vmatpush.msra.mxu0 0.0
    %497 = vmatpush.msra.mxu0 0.0
    %498 = vmatpush.msra.mxu0 0.0
    %499 = vmatpush.msra.mxu0 0.0
    %500 = vmatpush.msra.mxu0 0.0
    %501 = vmatpush.msra.mxu0 0.0
    %502 = vmatpush.msra.mxu0 0.0
    %503 = vmatpush.msra.mxu0 %v115
    %504 = vmatpush.msra.mxu0 %v114
    %505 = vmatpush.msra.mxu0 %v113
    %506 = vmatpush.msra.mxu0 %v112
    %507 = vmatmul.f32.gmra.mxu0 %v489
    %v508 = vpop.f32.mrf.mxu0
    %v509 = vadd.f32 0.0, %v508
    %510 = vdwg.mxu0
    %v511 = vadd.f32 %v488, %v509
    %v512 = vmul.f32 %v511, %v121
    %v513 = vtanh.pop %v512
    %v514 = vmul.f32 %v513, %v121
    %v515 = vadd.f32 %v514, %v122
    %v516 = vmul.f32 %v515, %v474
    %518 = vrot.lane.b32.xlu0 %v515, 64
    %v519 = vpop.permute.xlu0 %518
    %v521 = vmul.f32 %v515, %v519
    %523 = vrot.lane.b32.xlu0 %v521, 32
    %v524 = vpop.permute.xlu0 %523
    %v526 = vadd.f32 %v516, %v524
    %v527 = vtanh.pop %v526
    %529 = vrot.lane.b32.xlu0 %v527, 64
    %v530 = vpop.permute.xlu0 %529
    %v532 = vmul.f32 %v515, %v530
    %534 = vrot.lane.b32.xlu0 %v532, 32
    %v535 = vpop.permute.xlu0 %534
    %s537 = scalar_lea.vmem [#allocation3], 56
    %538 = vst.msk [vmem:[%s537] sm:$0xff] %vm124, %v535
    %v539 = vld [vmem:[#allocation3] sm:$0xff]
    %v540 = vld [vmem:[#allocation3 + $0x8] sm:$0xff]
    %v541 = vld [vmem:[#allocation3 + $0x10] sm:$0xff]
    %v542 = vld [vmem:[#allocation3 + $0x18] sm:$0xff]
    %v543 = vld [vmem:[#allocation3 + $0x20] sm:$0xff]
    %v544 = vld [vmem:[#allocation3 + $0x28] sm:$0xff]
    %v545 = vld [vmem:[#allocation3 + $0x30] sm:$0xff]
    %v546 = vld [vmem:[#allocation3 + $0x38] sm:$0xff]
    %v547 = vld [vmem:[%s4] sm:$0xff]
    %v548 = vld [vmem:[%s4 + $0x8] sm:$0xff]
    %v549 = vld [vmem:[%s4 + $0x10] sm:$0xff]
    %v550 = vld [vmem:[%s4 + $0x18] sm:$0xff]
    %v551 = vld [vmem:[%s5] sm:$0x1]
    %v553 = vperm.slane %v551, 0
    %v556 = vsel %vm124, %v539, 0
    %v559 = vsel %vm124, %v540, 0
    %v562 = vsel %vm124, %v541, 0
    %v565 = vsel %vm124, %v542, 0
    %v568 = vsel %vm124, %v543, 0
    %v571 = vsel %vm124, %v544, 0
    %v574 = vsel %vm124, %v545, 0
    %v577 = vsel %vm124, %v546, 0
    %579 = vmatpush.msra.mxu0 0.0
    %580 = vmatpush.msra.mxu0 0.0
    %581 = vmatpush.msra.mxu0 0.0
    %582 = vmatpush.msra.mxu0 0.0
    %583 = vmatpush.msra.mxu0 0.0
    %584 = vmatpush.msra.mxu0 0.0
    %585 = vmatpush.msra.mxu0 0.0
    %586 = vmatpush.msra.mxu0 0.0
    %587 = vmatpush.msra.mxu0 0.0
    %588 = vmatpush.msra.mxu0 0.0
    %589 = vmatpush.msra.mxu0 0.0
    %590 = vmatpush.msra.mxu0 0.0
    %591 = vmatpush.msra.mxu0 %v550
    %592 = vmatpush.msra.mxu0 %v549
    %593 = vmatpush.msra.mxu0 %v548
    %594 = vmatpush.msra.mxu0 %v547
    %595 = vmatmul.f32.gmra.mxu0 %v556
    %v596 = vpop.f32.mrf.mxu0
    %v597 = vadd.f32 %v553, %v596
    %598 = vmatmul.f32.gmra.mxu0 %v559
    %v599 = vpop.f32.mrf.mxu0
    %v600 = vadd.f32 %v553, %v599
    %601 = vmatmul.f32.gmra.mxu0 %v562
    %v602 = vpop.f32.mrf.mxu0
    %v603 = vadd.f32 %v553, %v602
    %604 = vmatmul.f32.gmra.mxu0 %v565
    %v605 = vpop.f32.mrf.mxu0
    %v606 = vadd.f32 %v553, %v605
    %607 = vmatmul.f32.gmra.mxu0 %v568
    %v608 = vpop.f32.mrf.mxu0
    %v609 = vadd.f32 %v553, %v608
    %610 = vmatmul.f32.gmra.mxu0 %v571
    %v611 = vpop.f32.mrf.mxu0
    %v612 = vadd.f32 %v553, %v611
    %613 = vmatmul.f32.gmra.mxu0 %v574
    %v614 = vpop.f32.mrf.mxu0
    %v615 = vadd.f32 %v553, %v614
    %616 = vmatmul.f32.gmra.mxu0 %v577
    %v617 = vpop.f32.mrf.mxu0
    %v618 = vadd.f32 %v553, %v617
    %619 = vdwg.mxu0
    %620 = vst [vmem:[#allocation4] sm:$0xff] %v597
    %621 = vst [vmem:[#allocation4 + $0x8] sm:$0xff] %v600
    %622 = vst [vmem:[#allocation4 + $0x10] sm:$0xff] %v603
    %623 = vst [vmem:[#allocation4 + $0x18] sm:$0xff] %v606
    %624 = vst [vmem:[#allocation4 + $0x20] sm:$0xff] %v609
    %625 = vst [vmem:[#allocation4 + $0x28] sm:$0xff] %v612
    %626 = vst [vmem:[#allocation4 + $0x30] sm:$0xff] %v615
    %627 = vst [vmem:[#allocation4 + $0x38] sm:$0xff] %v618
    // Predicated region
    $region26: #{tpu_custom_call.1} parent=1 // pred_check
      _
    $region27: #{tpu_custom_call.1} parent=1 // pred_check_branch
      %629 = sbr.rel (0) target = $region29
    $region28: #{tpu_custom_call.1} parent=1 // pred_region
      %631 = vsyncadd [#allocation5], 0
      %s632 = sshll.u32 [#allocation4], 4
      %s633 = int_to_ptr.vmem [resolvable:$true] %s632
      %s634 = sshll.u32 %s6, 4
      %s635 = int_to_ptr.hbm [resolvable:$true] %s634
      %640 = dma.vmem_to_hbm [thread:$0]  %s633, 1024, %s635, [#allocation5], 128, 128, 8
    $region29: #{tpu_custom_call.1} parent=1 // pred_fallthru
      _
    // Predicated region
    $region30: #{tpu_custom_call.1} parent=1 // pred_check
      _
    $region31: #{tpu_custom_call.1} parent=1 // pred_check_branch
      %642 = sbr.rel (0) target = $region33
    $region32: #{tpu_custom_call.1} parent=1 // pred_region
      %644 = dma.done [#allocation5], 1024
    $region33: #{tpu_custom_call.1} parent=1 // pred_fallthru
      _
    %645 = vsyncpa [#allocation5], 1

</llo_original>
